<compile_context>
chip_gen: v6e
topology: v6e:2x2x1
jax: 0.10.0
libtpu: 0.0.40
codegen_flags: <defaults>
</compile_context>

<pallas_src>
import functools

import jax
import jax.numpy as jnp
from jax.experimental import pallas as pl
from jax.experimental.pallas import tpu as pltpu

FC_PAD = 128   # fc64 output padded from 64 -> 128 lanes
OUT_PAD = 128  # fc5 output padded from 5 -> 128 lanes
FC_NUM = 64
NUM_CLASSES = 5


def grnet_kernel(x_ref, wfc_ref, wr1_ref, wr2_ref, gamma_ref, beta_ref,
                 w64_ref, mask_ref, w5_ref, out_ref):
    # Load activation tile, cast to bf16 for the MXU (accumulate in f32).
    x = x_ref[...].astype(jnp.bfloat16)

    # self.fc : Linear(L, L, bias=False)
    h = jnp.dot(x, wfc_ref[...], preferred_element_type=jnp.float32)

    # self.res_main : ResidualBlockMain(L)  (assumed: h + W2 @ relu(W1 @ h))
    r = jnp.maximum(
        jnp.dot(h.astype(jnp.bfloat16), wr1_ref[...],
                preferred_element_type=jnp.float32), 0.0)
    r = jnp.dot(r.astype(jnp.bfloat16), wr2_ref[...],
                preferred_element_type=jnp.float32)
    h = h + r

    # self.norm : LayerNorm(L), eps = 1e-5, elementwise affine (f32).
    mean = jnp.mean(h, axis=-1, keepdims=True)
    cent = h - mean
    var = jnp.mean(cent * cent, axis=-1, keepdims=True)
    h = cent * jax.lax.rsqrt(var + 1e-5)
    h = h * gamma_ref[...] + beta_ref[...]          # gamma/beta are (1, L) f32

    # self.relu
    h = jnp.maximum(h, 0.0)

    # self.fc64 : Linear(L, 64, bias=False), output padded to 128 lanes
    # (padded weight columns are zero).
    logits = jnp.dot(h.astype(jnp.bfloat16), w64_ref[...],
                     preferred_element_type=jnp.float32)        # (TB, 128)

    # self.sftmx : Softmax over the feature axis.  Additive resident mask
    # (0 for the first 64 lanes, -1e30 for the padded ones) so exp() makes
    # the padded lanes exactly 0 and the denominator is unaffected.
    logits = logits + mask_ref[...]
    m = jnp.max(logits, axis=-1, keepdims=True)
    e = jnp.exp(logits - m)
    denom = jnp.sum(e, axis=-1, keepdims=True)
    p = (e / denom).astype(jnp.bfloat16)            # probs in [0,1] -> bf16 ok

    # self.fc5 : Linear(64, 5, bias=False), bf16 weight padded to (128, 128)
    # so the output tile is lane-dense (padded rows/columns of w5 are zero).
    out_ref[...] = jnp.dot(p, w5_ref[...],
                           preferred_element_type=jnp.float32
                           ).astype(out_ref.dtype)


def prepare_params(params):
    """One-time weight prep: transpose to (in, out), bf16 cast, lane padding."""
    L = params["fc_w"].shape[0]
    wfc = params["fc_w"].T.astype(jnp.bfloat16)        # (L, L)
    wr1 = params["res_w1"].T.astype(jnp.bfloat16)      # (L, L)
    wr2 = params["res_w2"].T.astype(jnp.bfloat16)      # (L, L)

    # fc64: (64, L) -> (L, 64) -> zero-pad to (L, 128), bf16.
    w64 = params["fc64_w"].T.astype(jnp.bfloat16)
    w64 = jnp.pad(w64, ((0, 0), (0, FC_PAD - FC_NUM)))

    # fc5: (5, 64) -> (64, 5) -> zero-pad to (128, 128), bf16 (MXU-native).
    w5 = params["fc5_w"].T.astype(jnp.bfloat16)
    w5 = jnp.pad(w5, ((0, FC_PAD - FC_NUM), (0, OUT_PAD - NUM_CLASSES)))

    gamma = params["ln_gamma"].reshape(1, L).astype(jnp.float32)
    beta = params["ln_beta"].reshape(1, L).astype(jnp.float32)

    # Additive softmax mask for the padded logit lanes (resident, f32).
    mask = jnp.where(jnp.arange(FC_PAD) < FC_NUM, 0.0, -1e30)
    mask = mask.astype(jnp.float32).reshape(1, FC_PAD)

    return {"wfc": wfc, "wr1": wr1, "wr2": wr2, "gamma": gamma, "beta": beta,
            "w64": w64, "mask": mask, "w5": w5}


def _round_up(n, m):
    return ((n + m - 1) // m) * m


def _pick_tb(batch, tb_max=512):
    """Large batch tile (amortize step overhead) but keep >= 2 grid steps
    when possible (v7x has 2 TensorCores); multiple of 16 for bf16 output."""
    b = _round_up(max(int(batch), 1), 16)
    half = _round_up((b + 1) // 2, 16)
    return max(16, min(tb_max, half))


@functools.partial(jax.jit, static_argnames=("tb",))
def _grnet_forward_impl(x, prep, *, tb):
    B, L = x.shape
    # Pad batch so every grid step gets a full (tb, L) tile.
    B_pad = pl.cdiv(B, tb) * tb
    if B_pad != B:
        x = jnp.pad(x, ((0, B_pad - B), (0, 0)))

    grid = (B_pad // tb,)

    cost = pl.CostEstimate(
        flops=2 * B_pad * (3 * L * L + L * FC_PAD + FC_PAD * OUT_PAD),
        transcendentals=B_pad * (FC_PAD + 1),  # exp per lane + rsqrt
        bytes_accessed=(x.size * x.dtype.itemsize
                        + (prep["wfc"].size + prep["wr1"].size
                           + prep["wr2"].size + prep["w64"].size
                           + prep["w5"].size) * 2
                        + (prep["gamma"].size + prep["beta"].size
                           + prep["mask"].size) * 4
                        + B_pad * OUT_PAD * 2),
    )

    out = pl.pallas_call(
        grnet_kernel,
        out_shape=jax.ShapeDtypeStruct((B_pad, OUT_PAD), jnp.bfloat16),
        grid=grid,
        in_specs=[
            pl.BlockSpec((tb, L), lambda i: (i, 0)),            # x (pipelined)
            pl.BlockSpec((L, L), lambda i: (0, 0)),             # wfc (resident)
            pl.BlockSpec((L, L), lambda i: (0, 0)),             # wr1
            pl.BlockSpec((L, L), lambda i: (0, 0)),             # wr2
            pl.BlockSpec((1, L), lambda i: (0, 0)),             # gamma
            pl.BlockSpec((1, L), lambda i: (0, 0)),             # beta
            pl.BlockSpec((L, FC_PAD), lambda i: (0, 0)),        # w64 (padded)
            pl.BlockSpec((1, FC_PAD), lambda i: (0, 0)),        # softmax mask
            pl.BlockSpec((FC_PAD, OUT_PAD), lambda i: (0, 0)),  # w5 (padded)
        ],
        out_specs=pl.BlockSpec((tb, OUT_PAD), lambda i: (i, 0)),
        compiler_params=pltpu.CompilerParams(
            dimension_semantics=("parallel",)),
        cost_estimate=cost,
    )(x, prep["wfc"], prep["wr1"], prep["wr2"], prep["gamma"], prep["beta"],
      prep["w64"], prep["mask"], prep["w5"])

    # Slice away batch padding and the 123 zero output-lane columns; upcast
    # the tiny (B, 5) result back to f32 for downstream use.
    return out[:B, :NUM_CLASSES].astype(jnp.float32)


def grnet_forward(x, prep, *, tb=None):
    """x: (B, L) float32 (or bfloat16).  prep: output of prepare_params."""
    if tb is None:
        tb = _pick_tb(x.shape[0])
    return _grnet_forward_impl(x, prep, tb=tb)


def init_params(key, len_vec):
    ks = jax.random.split(key, 5)
    scale = 1.0 / jnp.sqrt(jnp.float32(len_vec))
    return {
        "fc_w":    jax.random.normal(ks[0], (len_vec, len_vec), jnp.float32) * scale,
        "res_w1":  jax.random.normal(ks[1], (len_vec, len_vec), jnp.float32) * scale,
        "res_w2":  jax.random.normal(ks[2], (len_vec, len_vec), jnp.float32) * scale,
        "ln_gamma": jnp.ones((len_vec,), jnp.float32),
        "ln_beta":  jnp.zeros((len_vec,), jnp.float32),
        "fc64_w":  jax.random.normal(ks[3], (FC_NUM, len_vec), jnp.float32) * scale,
        "fc5_w":   jax.random.normal(ks[4], (NUM_CLASSES, FC_NUM), jnp.float32) * (1.0 / 8.0),
    }


def reference_forward(x, params):
    """Pure-JAX f32 reference of the same forward pass (sanity check)."""
    h = x @ params["fc_w"].T
    r = jnp.maximum(h @ params["res_w1"].T, 0.0) @ params["res_w2"].T
    h = h + r
    mean = jnp.mean(h, axis=-1, keepdims=True)
    var = jnp.mean((h - mean) ** 2, axis=-1, keepdims=True)
    h = (h - mean) / jnp.sqrt(var + 1e-5) * params["ln_gamma"] + params["ln_beta"]
    h = jnp.maximum(h, 0.0)
    h = h @ params["fc64_w"].T
    h = jax.nn.softmax(h, axis=-1)
    return h @ params["fc5_w"].T


if __name__ == "__main__":
    B, LEN_VEC = 64, 128
    key = jax.random.PRNGKey(0)
    kx, kp = jax.random.split(key)
    x = jax.random.normal(kx, (B, LEN_VEC), jnp.float32)
    params = init_params(kp, LEN_VEC)
    prep = prepare_params(params)   # one-time weight layout / bf16 / padding

    out = jax.block_until_ready(grnet_forward(x, prep))
    ref = jax.block_until_ready(reference_forward(x, params))

    assert out.shape == (B, NUM_CLASSES)
    # bf16 MXU operands / bf16 output => relaxed tolerance vs f32 ref.
    assert jnp.allclose(out, ref, atol=5e-2, rtol=5e-2), (
        f"max abs err {jnp.max(jnp.abs(out - ref))}")
    print("KERNEL_OK")
</pallas_src>

<mosaic_0001>
module attributes {stable_mosaic.version = 11 : i64} {
  func.func @grnet_kernel(%arg0: i32, %arg1: memref<32x128xf32, #tpu.memory_space<vmem>>, %arg2: memref<128x128xbf16, #tpu.memory_space<vmem>>, %arg3: memref<128x128xbf16, #tpu.memory_space<vmem>>, %arg4: memref<128x128xbf16, #tpu.memory_space<vmem>>, %arg5: memref<1x128xf32, #tpu.memory_space<vmem>>, %arg6: memref<1x128xf32, #tpu.memory_space<vmem>>, %arg7: memref<128x128xbf16, #tpu.memory_space<vmem>>, %arg8: memref<1x128xf32, #tpu.memory_space<vmem>>, %arg9: memref<128x128xbf16, #tpu.memory_space<vmem>>, %arg10: memref<32x128xbf16, #tpu.memory_space<vmem>>) attributes {dimension_semantics = [#tpu.dimension_semantics<parallel>], iteration_bounds = array<i64: 2>, scalar_prefetch = 0 : i64, scratch_operands = 0 : i64, tpu.core_type = #tpu.core_type<tc>, window_params = [{transform_indices = @transform_0, window_bounds = array<i64: 32, 128>}, {pipeline_mode = #tpu.pipeline_mode<synchronous>, transform_indices = @transform_1, window_bounds = array<i64: 128, 128>}, {pipeline_mode = #tpu.pipeline_mode<synchronous>, transform_indices = @transform_2, window_bounds = array<i64: 128, 128>}, {pipeline_mode = #tpu.pipeline_mode<synchronous>, transform_indices = @transform_3, window_bounds = array<i64: 128, 128>}, {pipeline_mode = #tpu.pipeline_mode<synchronous>, transform_indices = @transform_4, window_bounds = array<i64: 1, 128>}, {pipeline_mode = #tpu.pipeline_mode<synchronous>, transform_indices = @transform_5, window_bounds = array<i64: 1, 128>}, {pipeline_mode = #tpu.pipeline_mode<synchronous>, transform_indices = @transform_6, window_bounds = array<i64: 128, 128>}, {pipeline_mode = #tpu.pipeline_mode<synchronous>, transform_indices = @transform_7, window_bounds = array<i64: 1, 128>}, {pipeline_mode = #tpu.pipeline_mode<synchronous>, transform_indices = @transform_8, window_bounds = array<i64: 128, 128>}, {transform_indices = @transform_9, window_bounds = array<i64: 32, 128>}]} {
    %c0 = arith.constant 0 : index
    %c0_0 = arith.constant 0 : index
    %0 = vector.load %arg1[%c0, %c0_0] : memref<32x128xf32, #tpu.memory_space<vmem>>, vector<32x128xf32>
    %1 = arith.truncf %0 : vector<32x128xf32> to vector<32x128xbf16>
    %c0_1 = arith.constant 0 : index
    %c0_2 = arith.constant 0 : index
    %2 = vector.load %arg2[%c0_1, %c0_2] : memref<128x128xbf16, #tpu.memory_space<vmem>>, vector<128x128xbf16>
    %cst = arith.constant dense<0.000000e+00> : vector<32x128xf32>
    %3 = tpu.matmul %1, %2, %cst {dimension_numbers = #tpu.dot_dimension_numbers<[1], [0], [0], [1], [0, 0, 1, 1], [], []>} : vector<32x128xbf16>, vector<128x128xbf16>, vector<32x128xf32> -> vector<32x128xf32>
    %4 = arith.truncf %3 : vector<32x128xf32> to vector<32x128xbf16>
    %c0_3 = arith.constant 0 : index
    %c0_4 = arith.constant 0 : index
    %5 = vector.load %arg3[%c0_3, %c0_4] : memref<128x128xbf16, #tpu.memory_space<vmem>>, vector<128x128xbf16>
    %cst_5 = arith.constant dense<0.000000e+00> : vector<32x128xf32>
    %6 = tpu.matmul %4, %5, %cst_5 {dimension_numbers = #tpu.dot_dimension_numbers<[1], [0], [0], [1], [0, 0, 1, 1], [], []>} : vector<32x128xbf16>, vector<128x128xbf16>, vector<32x128xf32> -> vector<32x128xf32>
    %cst_6 = arith.constant 0.000000e+00 : f32
    %7 = vector.broadcast %cst_6 : f32 to vector<32x128xf32>
    %8 = arith.maximumf %6, %7 : vector<32x128xf32>
    %9 = arith.truncf %8 : vector<32x128xf32> to vector<32x128xbf16>
    %c0_7 = arith.constant 0 : index
    %c0_8 = arith.constant 0 : index
    %10 = vector.load %arg4[%c0_7, %c0_8] : memref<128x128xbf16, #tpu.memory_space<vmem>>, vector<128x128xbf16>
    %cst_9 = arith.constant dense<0.000000e+00> : vector<32x128xf32>
    %11 = tpu.matmul %9, %10, %cst_9 {dimension_numbers = #tpu.dot_dimension_numbers<[1], [0], [0], [1], [0, 0, 1, 1], [], []>} : vector<32x128xbf16>, vector<128x128xbf16>, vector<32x128xf32> -> vector<32x128xf32>
    %12 = arith.addf %3, %11 : vector<32x128xf32>
    %cst_10 = arith.constant dense<0.000000e+00> : vector<32xf32>
    %13 = vector.multi_reduction <add>, %12, %cst_10 [1] : vector<32x128xf32> to vector<32xf32>
    %14 = vector.shape_cast %13 : vector<32xf32> to vector<32x1xf32>
    %cst_11 = arith.constant 1.280000e+02 : f32
    %15 = vector.broadcast %cst_11 : f32 to vector<32x1xf32>
    %16 = arith.divf %14, %15 : vector<32x1xf32>
    %17 = vector.broadcast %16 : vector<32x1xf32> to vector<32x128xf32>
    %18 = arith.subf %12, %17 : vector<32x128xf32>
    %19 = arith.mulf %18, %18 : vector<32x128xf32>
    %cst_12 = arith.constant dense<0.000000e+00> : vector<32xf32>
    %20 = vector.multi_reduction <add>, %19, %cst_12 [1] : vector<32x128xf32> to vector<32xf32>
    %21 = vector.shape_cast %20 : vector<32xf32> to vector<32x1xf32>
    %cst_13 = arith.constant 1.280000e+02 : f32
    %22 = vector.broadcast %cst_13 : f32 to vector<32x1xf32>
    %23 = arith.divf %21, %22 : vector<32x1xf32>
    %cst_14 = arith.constant 9.99999974E-6 : f32
    %24 = vector.broadcast %cst_14 : f32 to vector<32x1xf32>
    %25 = arith.addf %23, %24 : vector<32x1xf32>
    %26 = math.rsqrt %25 : vector<32x1xf32>
    %27 = vector.broadcast %26 : vector<32x1xf32> to vector<32x128xf32>
    %28 = arith.mulf %18, %27 : vector<32x128xf32>
    %c0_15 = arith.constant 0 : index
    %c0_16 = arith.constant 0 : index
    %29 = vector.load %arg5[%c0_15, %c0_16] : memref<1x128xf32, #tpu.memory_space<vmem>>, vector<1x128xf32>
    %30 = vector.broadcast %29 : vector<1x128xf32> to vector<32x128xf32>
    %31 = arith.mulf %28, %30 : vector<32x128xf32>
    %c0_17 = arith.constant 0 : index
    %c0_18 = arith.constant 0 : index
    %32 = vector.load %arg6[%c0_17, %c0_18] : memref<1x128xf32, #tpu.memory_space<vmem>>, vector<1x128xf32>
    %33 = vector.broadcast %32 : vector<1x128xf32> to vector<32x128xf32>
    %34 = arith.addf %31, %33 : vector<32x128xf32>
    %cst_19 = arith.constant 0.000000e+00 : f32
    %35 = vector.broadcast %cst_19 : f32 to vector<32x128xf32>
    %36 = arith.maximumf %34, %35 : vector<32x128xf32>
    %37 = arith.truncf %36 : vector<32x128xf32> to vector<32x128xbf16>
    %c0_20 = arith.constant 0 : index
    %c0_21 = arith.constant 0 : index
    %38 = vector.load %arg7[%c0_20, %c0_21] : memref<128x128xbf16, #tpu.memory_space<vmem>>, vector<128x128xbf16>
    %cst_22 = arith.constant dense<0.000000e+00> : vector<32x128xf32>
    %39 = tpu.matmul %37, %38, %cst_22 {dimension_numbers = #tpu.dot_dimension_numbers<[1], [0], [0], [1], [0, 0, 1, 1], [], []>} : vector<32x128xbf16>, vector<128x128xbf16>, vector<32x128xf32> -> vector<32x128xf32>
    %c0_23 = arith.constant 0 : index
    %c0_24 = arith.constant 0 : index
    %40 = vector.load %arg8[%c0_23, %c0_24] : memref<1x128xf32, #tpu.memory_space<vmem>>, vector<1x128xf32>
    %41 = vector.broadcast %40 : vector<1x128xf32> to vector<32x128xf32>
    %42 = arith.addf %39, %41 : vector<32x128xf32>
    %cst_25 = arith.constant dense<0xFF800000> : vector<32xf32>
    %43 = vector.multi_reduction <maximumf>, %42, %cst_25 [1] : vector<32x128xf32> to vector<32xf32>
    %44 = vector.shape_cast %43 : vector<32xf32> to vector<32x1xf32>
    %45 = vector.broadcast %44 : vector<32x1xf32> to vector<32x128xf32>
    %46 = arith.subf %42, %45 : vector<32x128xf32>
    %47 = math.exp %46 : vector<32x128xf32>
    %cst_26 = arith.constant dense<0.000000e+00> : vector<32xf32>
    %48 = vector.multi_reduction <add>, %47, %cst_26 [1] : vector<32x128xf32> to vector<32xf32>
    %49 = vector.shape_cast %48 : vector<32xf32> to vector<32x1xf32>
    %50 = vector.broadcast %49 : vector<32x1xf32> to vector<32x128xf32>
    %51 = arith.divf %47, %50 : vector<32x128xf32>
    %52 = arith.truncf %51 : vector<32x128xf32> to vector<32x128xbf16>
    %c0_27 = arith.constant 0 : index
    %c0_28 = arith.constant 0 : index
    %53 = vector.load %arg9[%c0_27, %c0_28] : memref<128x128xbf16, #tpu.memory_space<vmem>>, vector<128x128xbf16>
    %cst_29 = arith.constant dense<0.000000e+00> : vector<32x128xf32>
    %54 = tpu.matmul %52, %53, %cst_29 {dimension_numbers = #tpu.dot_dimension_numbers<[1], [0], [0], [1], [0, 0, 1, 1], [], []>} : vector<32x128xbf16>, vector<128x128xbf16>, vector<32x128xf32> -> vector<32x128xf32>
    %55 = arith.truncf %54 : vector<32x128xf32> to vector<32x128xbf16>
    %c0_30 = arith.constant 0 : index
    %c0_31 = arith.constant 0 : index
    %56 = vector.load %arg10[%c0_30, %c0_31] : memref<32x128xbf16, #tpu.memory_space<vmem>>, vector<32x128xbf16>
    tpu.vector_store %arg10[%c0_30, %c0_31], %55 {strides = array<i32>} : memref<32x128xbf16, #tpu.memory_space<vmem>>, vector<32x128xbf16>,
    return
  }
  func.func @transform_0(%arg0: i32) -> (i32, i32) {
    %c0_i32 = arith.constant 0 : i32
    %c0_i32_0 = arith.constant 0 : i32
    return %arg0, %c0_i32 : i32, i32
  }
  func.func @transform_1(%arg0: i32) -> (i32, i32) {
    %c0_i32 = arith.constant 0 : i32
    %c0_i32_0 = arith.constant 0 : i32
    %c0_i32_1 = arith.constant 0 : i32
    return %c0_i32, %c0_i32_0 : i32, i32
  }
  func.func @transform_2(%arg0: i32) -> (i32, i32) {
    %c0_i32 = arith.constant 0 : i32
    %c0_i32_0 = arith.constant 0 : i32
    %c0_i32_1 = arith.constant 0 : i32
    return %c0_i32, %c0_i32_0 : i32, i32
  }
  func.func @transform_3(%arg0: i32) -> (i32, i32) {
    %c0_i32 = arith.constant 0 : i32
    %c0_i32_0 = arith.constant 0 : i32
    %c0_i32_1 = arith.constant 0 : i32
    return %c0_i32, %c0_i32_0 : i32, i32
  }
  func.func @transform_4(%arg0: i32) -> (i32, i32) {
    %c0_i32 = arith.constant 0 : i32
    %c0_i32_0 = arith.constant 0 : i32
    %c0_i32_1 = arith.constant 0 : i32
    return %c0_i32, %c0_i32_0 : i32, i32
  }
  func.func @transform_5(%arg0: i32) -> (i32, i32) {
    %c0_i32 = arith.constant 0 : i32
    %c0_i32_0 = arith.constant 0 : i32
    %c0_i32_1 = arith.constant 0 : i32
    return %c0_i32, %c0_i32_0 : i32, i32
  }
  func.func @transform_6(%arg0: i32) -> (i32, i32) {
    %c0_i32 = arith.constant 0 : i32
    %c0_i32_0 = arith.constant 0 : i32
    %c0_i32_1 = arith.constant 0 : i32
    return %c0_i32, %c0_i32_0 : i32, i32
  }
  func.func @transform_7(%arg0: i32) -> (i32, i32) {
    %c0_i32 = arith.constant 0 : i32
    %c0_i32_0 = arith.constant 0 : i32
    %c0_i32_1 = arith.constant 0 : i32
    return %c0_i32, %c0_i32_0 : i32, i32
  }
  func.func @transform_8(%arg0: i32) -> (i32, i32) {
    %c0_i32 = arith.constant 0 : i32
    %c0_i32_0 = arith.constant 0 : i32
    %c0_i32_1 = arith.constant 0 : i32
    return %c0_i32, %c0_i32_0 : i32, i32
  }
  func.func @transform_9(%arg0: i32) -> (i32, i32) {
    %c0_i32 = arith.constant 0 : i32
    %c0_i32_0 = arith.constant 0 : i32
    return %arg0, %c0_i32 : i32, i32
  }
}

</mosaic_0001>

<llo_original>
// kernel: _grnet_forward_impl.1
$region0: #{_grnet_forward_impl.1}
  #allocation0 [shape = 'u32[]', space=smem, size = 0x4, offset = 0x4, fixed_abs, tag = 'smem constant byte address 0x4 - core index']
  #allocation1 [shape = 'u32[144,128]{1,0:T(1,128)}', space=vmem, size = 0x12000, scoped, tag = 'internal scratch']
  %s0 = inlined_call_operand.hbm [shape: f32[64,128], index: 0, kind: input, shape index: {}]
  %s1 = inlined_call_operand.hbm [shape: bf16[128,128], index: 1, kind: input, shape index: {}]
  %s2 = inlined_call_operand.hbm [shape: bf16[128,128], index: 2, kind: input, shape index: {}]
  %s3 = inlined_call_operand.hbm [shape: bf16[128,128], index: 3, kind: input, shape index: {}]
  %s4 = inlined_call_operand.vmem [shape: f32[1,128], index: 4, kind: input, shape index: {}]
  %s5 = inlined_call_operand.hbm [shape: f32[1,128], index: 5, kind: input, shape index: {}]
  %s6 = inlined_call_operand.hbm [shape: bf16[128,128], index: 6, kind: input, shape index: {}]
  %s7 = inlined_call_operand.vmem [shape: f32[1,128], index: 7, kind: input, shape index: {}]
  %s8 = inlined_call_operand.hbm [shape: bf16[128,128], index: 8, kind: input, shape index: {}]
  %s9 = inlined_call_operand.vmem [shape: bf16[64,128], index: 9, kind: output, shape index: {}]
  %s10 = sld [smem:[#allocation0]]
  $region97: #{_grnet_forward_impl.1} parent=0
    _
  %s12 = ssub.s32 1, %s10
  %s13 = scalar_select 0, %s12, %s10
  $region1: #{_grnet_forward_impl.1} parent=0
    #allocation2 [shape = 'u8[32768]{0}', space=vmem, size = 0x8000, scoped, tag = 'input window, operand 0']
    #allocation3 [shape = 's32[2]{0}', space=sflag, size = 0x8, scoped, tag = 'scoped memory for _grnet_forward_impl.1']
    #allocation4 [shape = 'u8[32768]{0}', space=vmem, size = 0x8000, scoped, tag = 'input window, operand 1, single buffered']
    #allocation5 [shape = 's32[1]{0}', space=sflag, size = 0x4, scoped, tag = 'scoped memory for _grnet_forward_impl.1']
    #allocation6 [shape = 'u8[32768]{0}', space=vmem, size = 0x8000, scoped, tag = 'input window, operand 2, single buffered']
    #allocation7 [shape = 'u8[32768]{0}', space=vmem, size = 0x8000, scoped, tag = 'input window, operand 3, single buffered']
    #allocation8 [shape = 's32[1]{0}', space=sflag, size = 0x4, scoped, tag = 'scoped memory for _grnet_forward_impl.1']
    #allocation9 [shape = 'u8[512]{0}', space=vmem, size = 0x400, scoped, tag = 'input window, operand 5, single buffered']
    #allocation10 [shape = 'u8[32768]{0}', space=vmem, size = 0x8000, scoped, tag = 'input window, operand 6, single buffered']
    #allocation11 [shape = 's32[1]{0}', space=sflag, size = 0x4, scoped, tag = 'scoped memory for _grnet_forward_impl.1']
    #allocation12 [shape = 'u8[32768]{0}', space=vmem, size = 0x8000, scoped, tag = 'input window, operand 8, single buffered']
    %14 = vsyncpa [#allocation3], 0
    %s15 = scalar_lea.sflag [#allocation3], 1
    %16 = vsyncpa %s15, 0
    %17 = vsyncpa [#allocation5], 0
    %18 = vsyncpa [#allocation8], 0
    %19 = vsyncpa [#allocation11], 0
    loop: start=0, step=1, limit=4
    $region2: #{_grnet_forward_impl.1} parent=1 // loop_pre_header
      _
    $region3: #{_grnet_forward_impl.1} parent=1 // loop_header
      %s21 = sphi 0, %s25
      %p22 = scmp.ge.s32.totalorder %s21, 4
      %s31 = sphi 0, %s33
      %s34 = sphi 0, %s31
      %s35 = sphi 0, %s34
      %s51 = sphi 0, %s35
      %s55 = sphi 0, %s55
      %s57 = sphi 0, %s55
      %s58 = sphi 0, %s57
      %s72 = sphi 0, %s58
      %s76 = sphi 0, %s76
      %s78 = sphi 0, %s76
      %s79 = sphi 0, %s78
      %s93 = sphi 0, %s79
      %s97 = sphi 0, %s97
      %s99 = sphi 0, %s97
      %s100 = sphi 0, %s99
      %s114 = sphi 0, %s100
      %s118 = sphi 0, %s118
      %s120 = sphi 0, %s118
      %s121 = sphi 0, %s120
      %s135 = sphi 0, %s121
      %s139 = sphi 0, %s139
      %s141 = sphi 0, %s139
      %s142 = sphi 0, %s141
      %s156 = sphi 0, %s142
      %s160 = sphi 0, %s160
      %s162 = sphi 0, %s160
      %s163 = sphi 0, %s162
      %s177 = sphi 0, %s163
      %s181 = sphi 0, %s181
      %s183 = sphi 0, %s181
      %s184 = sphi 0, %s183
      %s198 = sphi 0, %s184
      %s202 = sphi 0, %s202
      %s204 = sphi 0, %s202
      %s205 = sphi 0, %s204
      %s219 = sphi 0, %s205
      %s225 = sphi 0, %s227
      %s228 = sphi 0, %s225
      %s229 = sphi 0, %s228
      %s245 = sphi 0, %s229
    $region4: #{_grnet_forward_impl.1} parent=1 // loop_header_branch
      %24 = sbr.rel (%p22) target = $region8
    $region5: #{_grnet_forward_impl.1} parent=1 // loop_body
      %s26 = ssub.s32 %s21, 1
      %s27 = ssub.s32 %s21, 2
      %s28 = sadd.s32 %s21, 1
      %s29 = ssub.s32 %s21, %s28
      %p30 = scmp.eq.s32.totalorder %s29, 0
      %s32 = sadd.s32 %s31, 1
      %s33 = scalar_select %p30, %s31, %s32
      %p36 = pneg %p30
      %p37 = scmp.eq.s32.totalorder %s21, 1
      %p38 = por %p36, %p37
      %p39 = scmp.ne.s32.totalorder %s31, %s34
      %p40 = scmp.eq.s32.totalorder %s21, 0
      %p41 = por %p39, %p40
      %p42 = scmp.ne.s32.totalorder %s31, %s34
      %p43 = scmp.eq.s32.totalorder %s26, 1
      %p44 = por %p42, %p43
      %p45 = scmp.ne.s32.totalorder %s34, %s35
      %p46 = scmp.eq.s32.totalorder %s26, 0
      %p47 = por %p45, %p46
      %p48 = scmp.ne.s32.totalorder %s34, %s35
      %p49 = scmp.eq.s32.totalorder %s27, 1
      %p50 = por %p48, %p49
      %p52 = scmp.ne.s32.totalorder %s35, %s51
      %p53 = scmp.eq.s32.totalorder %s27, 0
      %p54 = por %p52, %p53
      %s56 = sadd.s32 %s55, 1
      %p59 = scmp.eq.s32.totalorder %s21, 1
      %p60 = scmp.ne.s32.totalorder %s55, %s57
      %p61 = scmp.eq.s32.totalorder %s21, 0
      %p62 = por %p60, %p61
      %p63 = scmp.ne.s32.totalorder %s55, %s57
      %p64 = scmp.eq.s32.totalorder %s26, 1
      %p65 = por %p63, %p64
      %p66 = scmp.ne.s32.totalorder %s57, %s58
      %p67 = scmp.eq.s32.totalorder %s26, 0
      %p68 = por %p66, %p67
      %p69 = scmp.ne.s32.totalorder %s57, %s58
      %p70 = scmp.eq.s32.totalorder %s27, 1
      %p71 = por %p69, %p70
      %p73 = scmp.ne.s32.totalorder %s58, %s72
      %p74 = scmp.eq.s32.totalorder %s27, 0
      %p75 = por %p73, %p74
      %s77 = sadd.s32 %s76, 1
      %p80 = scmp.eq.s32.totalorder %s21, 1
      %p81 = scmp.ne.s32.totalorder %s76, %s78
      %p82 = scmp.eq.s32.totalorder %s21, 0
      %p83 = por %p81, %p82
      %p84 = scmp.ne.s32.totalorder %s76, %s78
      %p85 = scmp.eq.s32.totalorder %s26, 1
      %p86 = por %p84, %p85
      %p87 = scmp.ne.s32.totalorder %s78, %s79
      %p88 = scmp.eq.s32.totalorder %s26, 0
      %p89 = por %p87, %p88
      %p90 = scmp.ne.s32.totalorder %s78, %s79
      %p91 = scmp.eq.s32.totalorder %s27, 1
      %p92 = por %p90, %p91
      %p94 = scmp.ne.s32.totalorder %s79, %s93
      %p95 = scmp.eq.s32.totalorder %s27, 0
      %p96 = por %p94, %p95
      %s98 = sadd.s32 %s97, 1
      %p101 = scmp.eq.s32.totalorder %s21, 1
      %p102 = scmp.ne.s32.totalorder %s97, %s99
      %p103 = scmp.eq.s32.totalorder %s21, 0
      %p104 = por %p102, %p103
      %p105 = scmp.ne.s32.totalorder %s97, %s99
      %p106 = scmp.eq.s32.totalorder %s26, 1
      %p107 = por %p105, %p106
      %p108 = scmp.ne.s32.totalorder %s99, %s100
      %p109 = scmp.eq.s32.totalorder %s26, 0
      %p110 = por %p108, %p109
      %p111 = scmp.ne.s32.totalorder %s99, %s100
      %p112 = scmp.eq.s32.totalorder %s27, 1
      %p113 = por %p111, %p112
      %p115 = scmp.ne.s32.totalorder %s100, %s114
      %p116 = scmp.eq.s32.totalorder %s27, 0
      %p117 = por %p115, %p116
      %s119 = sadd.s32 %s118, 1
      %p122 = scmp.eq.s32.totalorder %s21, 1
      %p123 = scmp.ne.s32.totalorder %s118, %s120
      %p124 = scmp.eq.s32.totalorder %s21, 0
      %p125 = por %p123, %p124
      %p126 = scmp.ne.s32.totalorder %s118, %s120
      %p127 = scmp.eq.s32.totalorder %s26, 1
      %p128 = por %p126, %p127
      %p129 = scmp.ne.s32.totalorder %s120, %s121
      %p130 = scmp.eq.s32.totalorder %s26, 0
      %p131 = por %p129, %p130
      %p132 = scmp.ne.s32.totalorder %s120, %s121
      %p133 = scmp.eq.s32.totalorder %s27, 1
      %p134 = por %p132, %p133
      %p136 = scmp.ne.s32.totalorder %s121, %s135
      %p137 = scmp.eq.s32.totalorder %s27, 0
      %p138 = por %p136, %p137
      %s140 = sadd.s32 %s139, 1
      %p143 = scmp.eq.s32.totalorder %s21, 1
      %p144 = scmp.ne.s32.totalorder %s139, %s141
      %p145 = scmp.eq.s32.totalorder %s21, 0
      %p146 = por %p144, %p145
      %p147 = scmp.ne.s32.totalorder %s139, %s141
      %p148 = scmp.eq.s32.totalorder %s26, 1
      %p149 = por %p147, %p148
      %p150 = scmp.ne.s32.totalorder %s141, %s142
      %p151 = scmp.eq.s32.totalorder %s26, 0
      %p152 = por %p150, %p151
      %p153 = scmp.ne.s32.totalorder %s141, %s142
      %p154 = scmp.eq.s32.totalorder %s27, 1
      %p155 = por %p153, %p154
      %p157 = scmp.ne.s32.totalorder %s142, %s156
      %p158 = scmp.eq.s32.totalorder %s27, 0
      %p159 = por %p157, %p158
      %s161 = sadd.s32 %s160, 1
      %p164 = scmp.eq.s32.totalorder %s21, 1
      %p165 = scmp.ne.s32.totalorder %s160, %s162
      %p166 = scmp.eq.s32.totalorder %s21, 0
      %p167 = por %p165, %p166
      %p168 = scmp.ne.s32.totalorder %s160, %s162
      %p169 = scmp.eq.s32.totalorder %s26, 1
      %p170 = por %p168, %p169
      %p171 = scmp.ne.s32.totalorder %s162, %s163
      %p172 = scmp.eq.s32.totalorder %s26, 0
      %p173 = por %p171, %p172
      %p174 = scmp.ne.s32.totalorder %s162, %s163
      %p175 = scmp.eq.s32.totalorder %s27, 1
      %p176 = por %p174, %p175
      %p178 = scmp.ne.s32.totalorder %s163, %s177
      %p179 = scmp.eq.s32.totalorder %s27, 0
      %p180 = por %p178, %p179
      %s182 = sadd.s32 %s181, 1
      %p185 = scmp.eq.s32.totalorder %s21, 1
      %p186 = scmp.ne.s32.totalorder %s181, %s183
      %p187 = scmp.eq.s32.totalorder %s21, 0
      %p188 = por %p186, %p187
      %p189 = scmp.ne.s32.totalorder %s181, %s183
      %p190 = scmp.eq.s32.totalorder %s26, 1
      %p191 = por %p189, %p190
      %p192 = scmp.ne.s32.totalorder %s183, %s184
      %p193 = scmp.eq.s32.totalorder %s26, 0
      %p194 = por %p192, %p193
      %p195 = scmp.ne.s32.totalorder %s183, %s184
      %p196 = scmp.eq.s32.totalorder %s27, 1
      %p197 = por %p195, %p196
      %p199 = scmp.ne.s32.totalorder %s184, %s198
      %p200 = scmp.eq.s32.totalorder %s27, 0
      %p201 = por %p199, %p200
      %s203 = sadd.s32 %s202, 1
      %p206 = scmp.eq.s32.totalorder %s21, 1
      %p207 = scmp.ne.s32.totalorder %s202, %s204
      %p208 = scmp.eq.s32.totalorder %s21, 0
      %p209 = por %p207, %p208
      %p210 = scmp.ne.s32.totalorder %s202, %s204
      %p211 = scmp.eq.s32.totalorder %s26, 1
      %p212 = por %p210, %p211
      %p213 = scmp.ne.s32.totalorder %s204, %s205
      %p214 = scmp.eq.s32.totalorder %s26, 0
      %p215 = por %p213, %p214
      %p216 = scmp.ne.s32.totalorder %s204, %s205
      %p217 = scmp.eq.s32.totalorder %s27, 1
      %p218 = por %p216, %p217
      %p220 = scmp.ne.s32.totalorder %s205, %s219
      %p221 = scmp.eq.s32.totalorder %s27, 0
      %p222 = por %p220, %p221
      %s223 = ssub.s32 %s21, %s28
      %p224 = scmp.eq.s32.totalorder %s223, 0
      %s226 = sadd.s32 %s225, 1
      %s227 = scalar_select %p224, %s225, %s226
      %p230 = pneg %p224
      %p231 = scmp.eq.s32.totalorder %s21, 1
      %p232 = por %p230, %p231
      %p233 = scmp.ne.s32.totalorder %s225, %s228
      %p234 = scmp.eq.s32.totalorder %s21, 0
      %p235 = por %p233, %p234
      %p236 = scmp.ne.s32.totalorder %s225, %s228
      %p237 = scmp.eq.s32.totalorder %s26, 1
      %p238 = por %p236, %p237
      %p239 = scmp.ne.s32.totalorder %s228, %s229
      %p240 = scmp.eq.s32.totalorder %s26, 0
      %p241 = por %p239, %p240
      %p242 = scmp.ne.s32.totalorder %s228, %s229
      %p243 = scmp.eq.s32.totalorder %s27, 1
      %p244 = por %p242, %p243
      %p246 = scmp.ne.s32.totalorder %s229, %s245
      %p247 = scmp.eq.s32.totalorder %s27, 0
      %p248 = por %p246, %p247
      %p249 = scmp.le.s32.totalorder 1, %s21
      %p250 = scmp.lt.s32.totalorder %s21, 3
      %p251 = pnand %p249, %p250
      %p252 = pneg %p251
      // Predicated region
      $region9: #{_grnet_forward_impl.1} parent=5 // pred_check
        _
      $region10: #{_grnet_forward_impl.1} parent=5 // pred_check_branch
        %254 = sbr.rel (%p251) target = $region12
      $region11: #{_grnet_forward_impl.1} parent=5 // pred_region
        %s255 = ssub.s32 %s21, 1
        // Predicated region
        $region13: #{_grnet_forward_impl.1} parent=11 // pred_check
          %p256 = pneg %p68
        $region14: #{_grnet_forward_impl.1} parent=11 // pred_check_branch
          %258 = sbr.rel (%p256) target = $region16
        $region15: #{_grnet_forward_impl.1} parent=11 // pred_region
          %s260 = ssub.s32 1024, 1024
          %261 = vsyncadd [#allocation5], %s260
          %s262 = sshll.u32 [#allocation4], 4
          %s263 = int_to_ptr.vmem [resolvable:$true] %s262
          %268 = dma.hbm_to_vmem [thread:$0]  %s1, 1024, %s263, [#allocation5], 64, 64, 4
        $region16: #{_grnet_forward_impl.1} parent=11 // pred_fallthru
          _
        // Predicated region
        $region17: #{_grnet_forward_impl.1} parent=11 // pred_check
          %p269 = pneg %p89
        $region18: #{_grnet_forward_impl.1} parent=11 // pred_check_branch
          %271 = sbr.rel (%p269) target = $region20
        $region19: #{_grnet_forward_impl.1} parent=11 // pred_region
          %s273 = ssub.s32 1024, 1024
          %274 = vsyncadd [#allocation5], %s273
          %s275 = sshll.u32 [#allocation6], 4
          %s276 = int_to_ptr.vmem [resolvable:$true] %s275
          %281 = dma.hbm_to_vmem [thread:$0]  %s2, 1024, %s276, [#allocation5], 64, 64, 4
        $region20: #{_grnet_forward_impl.1} parent=11 // pred_fallthru
          _
        // Predicated region
        $region21: #{_grnet_forward_impl.1} parent=11 // pred_check
          %p282 = pneg %p110
        $region22: #{_grnet_forward_impl.1} parent=11 // pred_check_branch
          %284 = sbr.rel (%p282) target = $region24
        $region23: #{_grnet_forward_impl.1} parent=11 // pred_region
          %s286 = ssub.s32 1024, 1024
          %287 = vsyncadd [#allocation8], %s286
          %s288 = sshll.u32 [#allocation7], 4
          %s289 = int_to_ptr.vmem [resolvable:$true] %s288
          %294 = dma.hbm_to_vmem [thread:$0]  %s3, 1024, %s289, [#allocation8], 64, 64, 4
        $region24: #{_grnet_forward_impl.1} parent=11 // pred_fallthru
          _
        // Predicated region
        $region25: #{_grnet_forward_impl.1} parent=11 // pred_check
          %p295 = pneg %p131
        $region26: #{_grnet_forward_impl.1} parent=11 // pred_check_branch
          %297 = sbr.rel (%p295) target = $region28
        $region27: #{_grnet_forward_impl.1} parent=11 // pred_region
          _
        $region28: #{_grnet_forward_impl.1} parent=11 // pred_fallthru
          _
        // Predicated region
        $region29: #{_grnet_forward_impl.1} parent=11 // pred_check
          %p298 = pneg %p152
        $region30: #{_grnet_forward_impl.1} parent=11 // pred_check_branch
          %300 = sbr.rel (%p298) target = $region32
        $region31: #{_grnet_forward_impl.1} parent=11 // pred_region
          %s302 = ssub.s32 16, 16
          %303 = vsyncadd [#allocation8], %s302
          %s305 = sshll.u32 [#allocation9], 4
          %s306 = int_to_ptr.vmem [resolvable:$true] %s305
          %308 = dma.hbm_to_vmem [thread:$0]  %s5, 16, %s306, [#allocation8]
        $region32: #{_grnet_forward_impl.1} parent=11 // pred_fallthru
          _
        // Predicated region
        $region33: #{_grnet_forward_impl.1} parent=11 // pred_check
          %p309 = pneg %p173
        $region34: #{_grnet_forward_impl.1} parent=11 // pred_check_branch
          %311 = sbr.rel (%p309) target = $region36
        $region35: #{_grnet_forward_impl.1} parent=11 // pred_region
          %s313 = ssub.s32 1024, 1024
          %314 = vsyncadd [#allocation11], %s313
          %s315 = sshll.u32 [#allocation10], 4
          %s316 = int_to_ptr.vmem [resolvable:$true] %s315
          %321 = dma.hbm_to_vmem [thread:$0]  %s6, 1024, %s316, [#allocation11], 64, 64, 4
        $region36: #{_grnet_forward_impl.1} parent=11 // pred_fallthru
          _
        // Predicated region
        $region37: #{_grnet_forward_impl.1} parent=11 // pred_check
          %p322 = pneg %p194
        $region38: #{_grnet_forward_impl.1} parent=11 // pred_check_branch
          %324 = sbr.rel (%p322) target = $region40
        $region39: #{_grnet_forward_impl.1} parent=11 // pred_region
          _
        $region40: #{_grnet_forward_impl.1} parent=11 // pred_fallthru
          _
        // Predicated region
        $region41: #{_grnet_forward_impl.1} parent=11 // pred_check
          %p325 = pneg %p215
        $region42: #{_grnet_forward_impl.1} parent=11 // pred_check_branch
          %327 = sbr.rel (%p325) target = $region44
        $region43: #{_grnet_forward_impl.1} parent=11 // pred_region
          %s329 = ssub.s32 1024, 1024
          %330 = vsyncadd [#allocation11], %s329
          %s331 = sshll.u32 [#allocation12], 4
          %s332 = int_to_ptr.vmem [resolvable:$true] %s331
          %337 = dma.hbm_to_vmem [thread:$0]  %s8, 1024, %s332, [#allocation11], 64, 64, 4
        $region44: #{_grnet_forward_impl.1} parent=11 // pred_fallthru
          _
      $region12: #{_grnet_forward_impl.1} parent=5 // pred_fallthru
        _
      %p338 = scmp.lt.s32.totalorder %s21, 2
      // Predicated region
      $region45: #{_grnet_forward_impl.1} parent=5 // pred_check
        %p339 = pneg %p338
      $region46: #{_grnet_forward_impl.1} parent=5 // pred_check_branch
        %341 = sbr.rel (%p339) target = $region48
      $region47: #{_grnet_forward_impl.1} parent=5 // pred_region
        // Predicated region
        $region49: #{_grnet_forward_impl.1} parent=47 // pred_check
          %p342 = pneg %p41
        $region50: #{_grnet_forward_impl.1} parent=47 // pred_check_branch
          %344 = sbr.rel (%p342) target = $region52
        $region51: #{_grnet_forward_impl.1} parent=47 // pred_region
          %s345 = sand.u32 %s31, 1
          %s346 = scalar_lea.sflag [#allocation3], %s345
          %s347 = sand.u32 %s31, 1
          %s348 = smul.addr %s347, 32
          %s349 = scalar_lea.vmem [#allocation2], %s348
          %s350 = smul.u32 4, %s21
          %s352 = ssub.s32 512, 512
          %353 = vsyncadd %s346, %s352
          %s354 = smul.addr %s350, 128
          %s355 = scalar_lea.hbm %s0, %s354
          %s356 = sshll.u32 %s349, 4
          %s357 = int_to_ptr.vmem [resolvable:$true] %s356
          %362 = dma.hbm_to_vmem [thread:$0]  %s355, 512, %s357, %s346, 128, 128, 8
        $region52: #{_grnet_forward_impl.1} parent=47 // pred_fallthru
          _
      $region48: #{_grnet_forward_impl.1} parent=5 // pred_fallthru
        _
      %p363 = scmp.le.s32.totalorder 1, %s21
      %p364 = scmp.lt.s32.totalorder %s21, 3
      %p365 = pnand %p363, %p364
      %p366 = pneg %p365
      // Predicated region
      $region53: #{_grnet_forward_impl.1} parent=5 // pred_check
        _
      $region54: #{_grnet_forward_impl.1} parent=5 // pred_check_branch
        %368 = sbr.rel (%p365) target = $region56
      $region55: #{_grnet_forward_impl.1} parent=5 // pred_region
        %s369 = ssub.s32 %s21, 1
        %s370 = sand.u32 %s34, 1
        %s371 = scalar_lea.sflag [#allocation3], %s370
        %s372 = sand.u32 %s34, 1
        %s373 = smul.addr %s372, 32
        %s374 = scalar_lea.vmem [#allocation2], %s373
        // Predicated region
        $region57: #{_grnet_forward_impl.1} parent=55 // pred_check
          %p375 = pneg %p47
        $region58: #{_grnet_forward_impl.1} parent=55 // pred_check_branch
          %377 = sbr.rel (%p375) target = $region60
        $region59: #{_grnet_forward_impl.1} parent=55 // pred_region
          %378 = dma.done %s371, 512
        $region60: #{_grnet_forward_impl.1} parent=55 // pred_fallthru
          _
        // Predicated region
        $region61: #{_grnet_forward_impl.1} parent=55 // pred_check
          %p379 = pneg %p68
        $region62: #{_grnet_forward_impl.1} parent=55 // pred_check_branch
          %381 = sbr.rel (%p379) target = $region64
        $region63: #{_grnet_forward_impl.1} parent=55 // pred_region
          %382 = dma.done [#allocation5], 1024
        $region64: #{_grnet_forward_impl.1} parent=55 // pred_fallthru
          _
        // Predicated region
        $region65: #{_grnet_forward_impl.1} parent=55 // pred_check
          %p383 = pneg %p89
        $region66: #{_grnet_forward_impl.1} parent=55 // pred_check_branch
          %385 = sbr.rel (%p383) target = $region68
        $region67: #{_grnet_forward_impl.1} parent=55 // pred_region
          %386 = dma.done [#allocation5], 1024
        $region68: #{_grnet_forward_impl.1} parent=55 // pred_fallthru
          _
        // Predicated region
        $region69: #{_grnet_forward_impl.1} parent=55 // pred_check
          %p387 = pneg %p110
        $region70: #{_grnet_forward_impl.1} parent=55 // pred_check_branch
          %389 = sbr.rel (%p387) target = $region72
        $region71: #{_grnet_forward_impl.1} parent=55 // pred_region
          %390 = dma.done [#allocation8], 1024
        $region72: #{_grnet_forward_impl.1} parent=55 // pred_fallthru
          _
        // Predicated region
        $region73: #{_grnet_forward_impl.1} parent=55 // pred_check
          %p391 = pneg %p152
        $region74: #{_grnet_forward_impl.1} parent=55 // pred_check_branch
          %393 = sbr.rel (%p391) target = $region76
        $region75: #{_grnet_forward_impl.1} parent=55 // pred_region
          %394 = dma.done [#allocation8], 16
        $region76: #{_grnet_forward_impl.1} parent=55 // pred_fallthru
          _
        // Predicated region
        $region77: #{_grnet_forward_impl.1} parent=55 // pred_check
          %p395 = pneg %p173
        $region78: #{_grnet_forward_impl.1} parent=55 // pred_check_branch
          %397 = sbr.rel (%p395) target = $region80
        $region79: #{_grnet_forward_impl.1} parent=55 // pred_region
          %398 = dma.done [#allocation11], 1024
        $region80: #{_grnet_forward_impl.1} parent=55 // pred_fallthru
          _
        // Predicated region
        $region81: #{_grnet_forward_impl.1} parent=55 // pred_check
          %p399 = pneg %p215
        $region82: #{_grnet_forward_impl.1} parent=55 // pred_check_branch
          %401 = sbr.rel (%p399) target = $region84
        $region83: #{_grnet_forward_impl.1} parent=55 // pred_region
          %402 = dma.done [#allocation11], 1024
        $region84: #{_grnet_forward_impl.1} parent=55 // pred_fallthru
          _
        %s403 = sand.u32 %s34, 1
        %s404 = scalar_lea.sflag [#allocation3], %s403
        %s405 = sand.u32 %s34, 1
        %s406 = smul.addr %s405, 32
        %s407 = scalar_lea.vmem [#allocation2], %s406
        %p408 = pneg %p47
        %p409 = pneg %p44
        %p410 = pneg %p68
        %p411 = pneg %p65
        %p412 = pneg %p89
        %p413 = pneg %p86
        %p414 = pneg %p110
        %p415 = pneg %p107
        %p416 = pneg %p131
        %p417 = pneg %p128
        %p418 = pneg %p152
        %p419 = pneg %p149
        %p420 = pneg %p173
        %p421 = pneg %p170
        %p422 = pneg %p194
        %p423 = pneg %p191
        %p424 = pneg %p215
        %p425 = pneg %p212
        %p426 = pneg %p241
        %p427 = pneg %p238
        %s428 = smul.u32 4, %s26
        %p429 = scmp.lt.s32.totalorder %s428, 7
        %s430 = scalar_select %p429, %s428, 7
        %s431 = smul.addr %s430, 4
        %s432 = scalar_lea.vmem %s9, %s431
        %s433 = smul.u32 4, %s26
        %s434 = smul.u32 4, %s26
        %p435 = scmp.lt.s32.totalorder %s434, 7
        %s436 = scalar_select %p435, %s434, 7
        %s437 = smul.addr %s436, 4
        %s438 = scalar_lea.vmem %s9, %s437
        %s439 = smul.u32 4, %s26
        %v441 = vld [vmem:[%s374] sm:$0xff]
        %v442 = vld [vmem:[%s374 + $0x8] sm:$0xff]
        %v443 = vld [vmem:[%s374 + $0x10] sm:$0xff]
        %v444 = vld [vmem:[%s374 + $0x18] sm:$0xff]
        %v445 = vpack.c.bf16 %v442, %v441
        %v446 = vpack.c.bf16 %v444, %v443
        %v447 = vld [vmem:[#allocation4] sm:$0xf]
        %v448 = vld [vmem:[#allocation4 + $0x4] sm:$0xf]
        %v449 = vld [vmem:[#allocation4 + $0x8] sm:$0xf]
        %v450 = vld [vmem:[#allocation4 + $0xc] sm:$0xf]
        %v451 = vld [vmem:[#allocation4 + $0x10] sm:$0xf]
        %v452 = vld [vmem:[#allocation4 + $0x14] sm:$0xf]
        %v453 = vld [vmem:[#allocation4 + $0x18] sm:$0xf]
        %v454 = vld [vmem:[#allocation4 + $0x1c] sm:$0xf]
        %v455 = vld [vmem:[#allocation4 + $0x20] sm:$0xf]
        %v456 = vld [vmem:[#allocation4 + $0x24] sm:$0xf]
        %v457 = vld [vmem:[#allocation4 + $0x28] sm:$0xf]
        %v458 = vld [vmem:[#allocation4 + $0x2c] sm:$0xf]
        %v459 = vld [vmem:[#allocation4 + $0x30] sm:$0xf]
        %v460 = vld [vmem:[#allocation4 + $0x34] sm:$0xf]
        %v461 = vld [vmem:[#allocation4 + $0x38] sm:$0xf]
        %v462 = vld [vmem:[#allocation4 + $0x3c] sm:$0xf]
        %v479 = vunpack.c.l.b16 %v447
        %v480 = vunpack.c.l.b16 %v448
        %v481 = vunpack.c.l.b16 %v449
        %v482 = vunpack.c.l.b16 %v450
        %v483 = vunpack.c.l.b16 %v451
        %v484 = vunpack.c.l.b16 %v452
        %v485 = vunpack.c.l.b16 %v453
        %v486 = vunpack.c.l.b16 %v454
        %v487 = vunpack.c.l.b16 %v455
        %v488 = vunpack.c.l.b16 %v456
        %v489 = vunpack.c.l.b16 %v457
        %v490 = vunpack.c.l.b16 %v458
        %v491 = vunpack.c.l.b16 %v459
        %v492 = vunpack.c.l.b16 %v460
        %v493 = vunpack.c.l.b16 %v461
        %v494 = vunpack.c.l.b16 %v462
        %v495 = vpack.c.b16 %v480, %v479
        %v496 = vpack.c.b16 %v482, %v481
        %v497 = vpack.c.b16 %v484, %v483
        %v498 = vpack.c.b16 %v486, %v485
        %v499 = vpack.c.b16 %v488, %v487
        %v500 = vpack.c.b16 %v490, %v489
        %v501 = vpack.c.b16 %v492, %v491
        %v502 = vpack.c.b16 %v494, %v493
        %511 = vmatprep.subr.bf16.mxu0 0
        %512 = vmatpush1.bf16.msra.mxu0 %v502
        %513 = vmatprep.subr.bf16.mxu0 0
        %514 = vmatpush1.bf16.msra.mxu0 %v501
        %515 = vmatprep.subr.bf16.mxu0 0
        %516 = vmatpush1.bf16.msra.mxu0 %v500
        %517 = vmatprep.subr.bf16.mxu0 0
        %518 = vmatpush1.bf16.msra.mxu0 %v499
        %519 = vmatprep.subr.bf16.mxu0 0
        %520 = vmatpush1.bf16.msra.mxu0 %v498
        %521 = vmatprep.subr.bf16.mxu0 0
        %522 = vmatpush1.bf16.msra.mxu0 %v497
        %523 = vmatprep.subr.bf16.mxu0 0
        %524 = vmatpush1.bf16.msra.mxu0 %v496
        %525 = vmatprep.subr.bf16.mxu0 0
        %526 = vmatpush1.bf16.msra.mxu0 %v495
        %527 = vmatprep.subr.bf16.mxu0 0
        %528 = vmatpush2.bf16.msra.mxu0 0
        %529 = vmatprep.subr.bf16.mxu0 0
        %530 = vmatpush2.bf16.msra.mxu0 0
        %531 = vmatprep.subr.bf16.mxu0 0
        %532 = vmatpush2.bf16.msra.mxu0 0
        %533 = vmatprep.subr.bf16.mxu0 0
        %534 = vmatpush2.bf16.msra.mxu0 0
        %535 = vmatprep.subr.bf16.mxu0 0
        %536 = vmatpush2.bf16.msra.mxu0 0
        %537 = vmatprep.subr.bf16.mxu0 0
        %538 = vmatpush2.bf16.msra.mxu0 0
        %539 = vmatprep.subr.bf16.mxu0 0
        %540 = vmatpush2.bf16.msra.mxu0 0
        %541 = vmatprep.subr.bf16.mxu0 0
        %542 = vmatpush2.bf16.msra.mxu0 0
        %543 = vmatprep.mubr.bf16.mxu0 0
        %544 = vmatmul.mubr.bf16.gmra.mxu0 %v445
        %v545 = vpop.f32.mrf.mxu0
        %v546 = vadd.f32 0.0, %v545
        %v547 = vpop.f32.mrf.mxu0
        %v548 = vpop.f32.mrf.mxu0
        %v549 = vadd.f32 0.0, %v548
        %v550 = vpop.f32.mrf.mxu0
        %551 = vmatprep.mubr.bf16.mxu0 0
        %552 = vmatmul.mubr.bf16.gmra.mxu0 %v446
        %v553 = vpop.f32.mrf.mxu0
        %v554 = vadd.f32 0.0, %v553
        %v555 = vpop.f32.mrf.mxu0
        %v556 = vpop.f32.mrf.mxu0
        %v557 = vadd.f32 0.0, %v556
        %v558 = vpop.f32.mrf.mxu0
        %559 = vdwg.mxu0
        %v560 = vpack.c.bf16 %v549, %v546
        %v561 = vpack.c.bf16 %v557, %v554
        %v562 = vld [vmem:[#allocation6] sm:$0xf]
        %v563 = vld [vmem:[#allocation6 + $0x4] sm:$0xf]
        %v564 = vld [vmem:[#allocation6 + $0x8] sm:$0xf]
        %v565 = vld [vmem:[#allocation6 + $0xc] sm:$0xf]
        %v566 = vld [vmem:[#allocation6 + $0x10] sm:$0xf]
        %v567 = vld [vmem:[#allocation6 + $0x14] sm:$0xf]
        %v568 = vld [vmem:[#allocation6 + $0x18] sm:$0xf]
        %v569 = vld [vmem:[#allocation6 + $0x1c] sm:$0xf]
        %v570 = vld [vmem:[#allocation6 + $0x20] sm:$0xf]
        %v571 = vld [vmem:[#allocation6 + $0x24] sm:$0xf]
        %v572 = vld [vmem:[#allocation6 + $0x28] sm:$0xf]
        %v573 = vld [vmem:[#allocation6 + $0x2c] sm:$0xf]
        %v574 = vld [vmem:[#allocation6 + $0x30] sm:$0xf]
        %v575 = vld [vmem:[#allocation6 + $0x34] sm:$0xf]
        %v576 = vld [vmem:[#allocation6 + $0x38] sm:$0xf]
        %v577 = vld [vmem:[#allocation6 + $0x3c] sm:$0xf]
        %v594 = vunpack.c.l.b16 %v562
        %v595 = vunpack.c.l.b16 %v563
        %v596 = vunpack.c.l.b16 %v564
        %v597 = vunpack.c.l.b16 %v565
        %v598 = vunpack.c.l.b16 %v566
        %v599 = vunpack.c.l.b16 %v567
        %v600 = vunpack.c.l.b16 %v568
        %v601 = vunpack.c.l.b16 %v569
        %v602 = vunpack.c.l.b16 %v570
        %v603 = vunpack.c.l.b16 %v571
        %v604 = vunpack.c.l.b16 %v572
        %v605 = vunpack.c.l.b16 %v573
        %v606 = vunpack.c.l.b16 %v574
        %v607 = vunpack.c.l.b16 %v575
        %v608 = vunpack.c.l.b16 %v576
        %v609 = vunpack.c.l.b16 %v577
        %v610 = vpack.c.b16 %v595, %v594
        %v611 = vpack.c.b16 %v597, %v596
        %v612 = vpack.c.b16 %v599, %v598
        %v613 = vpack.c.b16 %v601, %v600
        %v614 = vpack.c.b16 %v603, %v602
        %v615 = vpack.c.b16 %v605, %v604
        %v616 = vpack.c.b16 %v607, %v606
        %v617 = vpack.c.b16 %v609, %v608
        %626 = vmatprep.subr.bf16.mxu0 0
        %627 = vmatpush1.bf16.msra.mxu0 %v617
        %628 = vmatprep.subr.bf16.mxu0 0
        %629 = vmatpush1.bf16.msra.mxu0 %v616
        %630 = vmatprep.subr.bf16.mxu0 0
        %631 = vmatpush1.bf16.msra.mxu0 %v615
        %632 = vmatprep.subr.bf16.mxu0 0
        %633 = vmatpush1.bf16.msra.mxu0 %v614
        %634 = vmatprep.subr.bf16.mxu0 0
        %635 = vmatpush1.bf16.msra.mxu0 %v613
        %636 = vmatprep.subr.bf16.mxu0 0
        %637 = vmatpush1.bf16.msra.mxu0 %v612
        %638 = vmatprep.subr.bf16.mxu0 0
        %639 = vmatpush1.bf16.msra.mxu0 %v611
        %640 = vmatprep.subr.bf16.mxu0 0
        %641 = vmatpush1.bf16.msra.mxu0 %v610
        %642 = vmatprep.subr.bf16.mxu0 0
        %643 = vmatpush2.bf16.msra.mxu0 0
        %644 = vmatprep.subr.bf16.mxu0 0
        %645 = vmatpush2.bf16.msra.mxu0 0
        %646 = vmatprep.subr.bf16.mxu0 0
        %647 = vmatpush2.bf16.msra.mxu0 0
        %648 = vmatprep.subr.bf16.mxu0 0
        %649 = vmatpush2.bf16.msra.mxu0 0
        %650 = vmatprep.subr.bf16.mxu0 0
        %651 = vmatpush2.bf16.msra.mxu0 0
        %652 = vmatprep.subr.bf16.mxu0 0
        %653 = vmatpush2.bf16.msra.mxu0 0
        %654 = vmatprep.subr.bf16.mxu0 0
        %655 = vmatpush2.bf16.msra.mxu0 0
        %656 = vmatprep.subr.bf16.mxu0 0
        %657 = vmatpush2.bf16.msra.mxu0 0
        %658 = vmatprep.mubr.bf16.mxu0 0
        %659 = vmatmul.mubr.bf16.gmra.mxu0 %v560
        %v660 = vpop.f32.mrf.mxu0
        %v661 = vadd.f32 0.0, %v660
        %v662 = vpop.f32.mrf.mxu0
        %v663 = vpop.f32.mrf.mxu0
        %v664 = vadd.f32 0.0, %v663
        %v665 = vpop.f32.mrf.mxu0
        %666 = vmatprep.mubr.bf16.mxu0 0
        %667 = vmatmul.mubr.bf16.gmra.mxu0 %v561
        %v668 = vpop.f32.mrf.mxu0
        %v669 = vadd.f32 0.0, %v668
        %v670 = vpop.f32.mrf.mxu0
        %v671 = vpop.f32.mrf.mxu0
        %v672 = vadd.f32 0.0, %v671
        %v673 = vpop.f32.mrf.mxu0
        %674 = vdwg.mxu0
        %v675 = vmax.f32 %v661, 0.0
        %v676 = vmax.f32 %v664, 0.0
        %v677 = vmax.f32 %v669, 0.0
        %v678 = vmax.f32 %v672, 0.0
        %v679 = vpack.c.bf16 %v676, %v675
        %v680 = vpack.c.bf16 %v678, %v677
        %v681 = vld [vmem:[#allocation7] sm:$0xf]
        %v682 = vld [vmem:[#allocation7 + $0x4] sm:$0xf]
        %v683 = vld [vmem:[#allocation7 + $0x8] sm:$0xf]
        %v684 = vld [vmem:[#allocation7 + $0xc] sm:$0xf]
        %v685 = vld [vmem:[#allocation7 + $0x10] sm:$0xf]
        %v686 = vld [vmem:[#allocation7 + $0x14] sm:$0xf]
        %v687 = vld [vmem:[#allocation7 + $0x18] sm:$0xf]
        %v688 = vld [vmem:[#allocation7 + $0x1c] sm:$0xf]
        %v689 = vld [vmem:[#allocation7 + $0x20] sm:$0xf]
        %v690 = vld [vmem:[#allocation7 + $0x24] sm:$0xf]
        %v691 = vld [vmem:[#allocation7 + $0x28] sm:$0xf]
        %v692 = vld [vmem:[#allocation7 + $0x2c] sm:$0xf]
        %v693 = vld [vmem:[#allocation7 + $0x30] sm:$0xf]
        %v694 = vld [vmem:[#allocation7 + $0x34] sm:$0xf]
        %v695 = vld [vmem:[#allocation7 + $0x38] sm:$0xf]
        %v696 = vld [vmem:[#allocation7 + $0x3c] sm:$0xf]
        %v713 = vunpack.c.l.b16 %v681
        %v714 = vunpack.c.l.b16 %v682
        %v715 = vunpack.c.l.b16 %v683
        %v716 = vunpack.c.l.b16 %v684
        %v717 = vunpack.c.l.b16 %v685
        %v718 = vunpack.c.l.b16 %v686
        %v719 = vunpack.c.l.b16 %v687
        %v720 = vunpack.c.l.b16 %v688
        %v721 = vunpack.c.l.b16 %v689
        %v722 = vunpack.c.l.b16 %v690
        %v723 = vunpack.c.l.b16 %v691
        %v724 = vunpack.c.l.b16 %v692
        %v725 = vunpack.c.l.b16 %v693
        %v726 = vunpack.c.l.b16 %v694
        %v727 = vunpack.c.l.b16 %v695
        %v728 = vunpack.c.l.b16 %v696
        %v729 = vpack.c.b16 %v714, %v713
        %v730 = vpack.c.b16 %v716, %v715
        %v731 = vpack.c.b16 %v718, %v717
        %v732 = vpack.c.b16 %v720, %v719
        %v733 = vpack.c.b16 %v722, %v721
        %v734 = vpack.c.b16 %v724, %v723
        %v735 = vpack.c.b16 %v726, %v725
        %v736 = vpack.c.b16 %v728, %v727
        %745 = vmatprep.subr.bf16.mxu0 0
        %746 = vmatpush1.bf16.msra.mxu0 %v736
        %747 = vmatprep.subr.bf16.mxu0 0
        %748 = vmatpush1.bf16.msra.mxu0 %v735
        %749 = vmatprep.subr.bf16.mxu0 0
        %750 = vmatpush1.bf16.msra.mxu0 %v734
        %751 = vmatprep.subr.bf16.mxu0 0
        %752 = vmatpush1.bf16.msra.mxu0 %v733
        %753 = vmatprep.subr.bf16.mxu0 0
        %754 = vmatpush1.bf16.msra.mxu0 %v732
        %755 = vmatprep.subr.bf16.mxu0 0
        %756 = vmatpush1.bf16.msra.mxu0 %v731
        %757 = vmatprep.subr.bf16.mxu0 0
        %758 = vmatpush1.bf16.msra.mxu0 %v730
        %759 = vmatprep.subr.bf16.mxu0 0
        %760 = vmatpush1.bf16.msra.mxu0 %v729
        %761 = vmatprep.subr.bf16.mxu0 0
        %762 = vmatpush2.bf16.msra.mxu0 0
        %763 = vmatprep.subr.bf16.mxu0 0
        %764 = vmatpush2.bf16.msra.mxu0 0
        %765 = vmatprep.subr.bf16.mxu0 0
        %766 = vmatpush2.bf16.msra.mxu0 0
        %767 = vmatprep.subr.bf16.mxu0 0
        %768 = vmatpush2.bf16.msra.mxu0 0
        %769 = vmatprep.subr.bf16.mxu0 0
        %770 = vmatpush2.bf16.msra.mxu0 0
        %771 = vmatprep.subr.bf16.mxu0 0
        %772 = vmatpush2.bf16.msra.mxu0 0
        %773 = vmatprep.subr.bf16.mxu0 0
        %774 = vmatpush2.bf16.msra.mxu0 0
        %775 = vmatprep.subr.bf16.mxu0 0
        %776 = vmatpush2.bf16.msra.mxu0 0
        %777 = vmatprep.mubr.bf16.mxu0 0
        %778 = vmatmul.mubr.bf16.gmra.mxu0 %v679
        %v779 = vpop.f32.mrf.mxu0
        %v780 = vadd.f32 0.0, %v779
        %v781 = vpop.f32.mrf.mxu0
        %v782 = vpop.f32.mrf.mxu0
        %v783 = vadd.f32 0.0, %v782
        %v784 = vpop.f32.mrf.mxu0
        %785 = vmatprep.mubr.bf16.mxu0 0
        %786 = vmatmul.mubr.bf16.gmra.mxu0 %v680
        %v787 = vpop.f32.mrf.mxu0
        %v788 = vadd.f32 0.0, %v787
        %v789 = vpop.f32.mrf.mxu0
        %v790 = vpop.f32.mrf.mxu0
        %v791 = vadd.f32 0.0, %v790
        %v792 = vpop.f32.mrf.mxu0
        %793 = vdwg.mxu0
        %v794 = vadd.f32 %v546, %v780
        %v795 = vadd.f32 %v549, %v783
        %v796 = vadd.f32 %v554, %v788
        %v797 = vadd.f32 %v557, %v791
        %798 = vadd.xlane.f32.xlu0 %v794
        %v799 = vpop.xlane.xlu0 %798
        %800 = vadd.xlane.f32.xlu0 %v795
        %v801 = vpop.xlane.xlu0 %800
        %802 = vadd.xlane.f32.xlu0 %v796
        %v803 = vpop.xlane.xlu0 %802
        %804 = vadd.xlane.f32.xlu0 %v797
        %v805 = vpop.xlane.xlu0 %804
        %v806 = vrcp.pop 128.0
        %v807 = vmul.f32 %v799, %v806
        %v808 = vmul.f32 %v801, %v806
        %v809 = vmul.f32 %v803, %v806
        %v810 = vmul.f32 %v805, %v806
        %v811 = vsub.f32 %v794, %v807
        %v812 = vsub.f32 %v795, %v808
        %v813 = vsub.f32 %v796, %v809
        %v814 = vsub.f32 %v797, %v810
        %v815 = vmul.f32 %v811, %v811
        %v816 = vmul.f32 %v812, %v812
        %v817 = vmul.f32 %v813, %v813
        %v818 = vmul.f32 %v814, %v814
        %819 = vadd.xlane.f32.xlu0 %v815
        %v820 = vpop.xlane.xlu0 %819
        %821 = vadd.xlane.f32.xlu0 %v816
        %v822 = vpop.xlane.xlu0 %821
        %823 = vadd.xlane.f32.xlu0 %v817
        %v824 = vpop.xlane.xlu0 %823
        %825 = vadd.xlane.f32.xlu0 %v818
        %v826 = vpop.xlane.xlu0 %825
        %v827 = vmul.f32 %v820, %v806
        %v828 = vmul.f32 %v822, %v806
        %v829 = vmul.f32 %v824, %v806
        %v830 = vmul.f32 %v826, %v806
        %v831 = vadd.f32 %v827, 1e-05
        %v832 = vadd.f32 %v828, 1e-05
        %v833 = vadd.f32 %v829, 1e-05
        %v834 = vadd.f32 %v830, 1e-05
        %v835 = vrsqrt.pop %v831
        %v836 = vrsqrt.pop %v832
        %v837 = vrsqrt.pop %v833
        %v838 = vrsqrt.pop %v834
        %v839 = vmul.f32 %v811, %v835
        %v840 = vmul.f32 %v812, %v836
        %v841 = vmul.f32 %v813, %v837
        %v842 = vmul.f32 %v814, %v838
        %v843 = vld [vmem:[%s4] sm:$0x1]
        %v845 = vlaneseq
        %v846 = vshrl.u32 %v845, 7
        %v847 = vsub.s32 0, %v846
        %v848 = vrot.slane %v843, %v847
        %v850 = vmul.f32 %v839, %v848
        %v851 = vmul.f32 %v840, %v848
        %v852 = vmul.f32 %v841, %v848
        %v853 = vmul.f32 %v842, %v848
        %v854 = vld [vmem:[#allocation9] sm:$0x1]
        %v856 = vlaneseq
        %v857 = vshrl.u32 %v856, 7
        %v858 = vsub.s32 0, %v857
        %v859 = vrot.slane %v854, %v858
        %v861 = vadd.f32 %v850, %v859
        %v862 = vadd.f32 %v851, %v859
        %v863 = vadd.f32 %v852, %v859
        %v864 = vadd.f32 %v853, %v859
        %v865 = vmax.f32 %v861, 0.0
        %v866 = vmax.f32 %v862, 0.0
        %v867 = vmax.f32 %v863, 0.0
        %v868 = vmax.f32 %v864, 0.0
        %v869 = vpack.c.bf16 %v866, %v865
        %v870 = vpack.c.bf16 %v868, %v867
        %v871 = vld [vmem:[#allocation10] sm:$0xf]
        %v872 = vld [vmem:[#allocation10 + $0x4] sm:$0xf]
        %v873 = vld [vmem:[#allocation10 + $0x8] sm:$0xf]
        %v874 = vld [vmem:[#allocation10 + $0xc] sm:$0xf]
        %v875 = vld [vmem:[#allocation10 + $0x10] sm:$0xf]
        %v876 = vld [vmem:[#allocation10 + $0x14] sm:$0xf]
        %v877 = vld [vmem:[#allocation10 + $0x18] sm:$0xf]
        %v878 = vld [vmem:[#allocation10 + $0x1c] sm:$0xf]
        %v879 = vld [vmem:[#allocation10 + $0x20] sm:$0xf]
        %v880 = vld [vmem:[#allocation10 + $0x24] sm:$0xf]
        %v881 = vld [vmem:[#allocation10 + $0x28] sm:$0xf]
        %v882 = vld [vmem:[#allocation10 + $0x2c] sm:$0xf]
        %v883 = vld [vmem:[#allocation10 + $0x30] sm:$0xf]
        %v884 = vld [vmem:[#allocation10 + $0x34] sm:$0xf]
        %v885 = vld [vmem:[#allocation10 + $0x38] sm:$0xf]
        %v886 = vld [vmem:[#allocation10 + $0x3c] sm:$0xf]
        %v887 = vld [vmem:[%s7] sm:$0x1]
        %v889 = vlaneseq
        %v890 = vshrl.u32 %v889, 7
        %v891 = vsub.s32 0, %v890
        %v892 = vrot.slane %v887, %v891
        %v910 = vunpack.c.l.b16 %v871
        %v911 = vunpack.c.l.b16 %v872
        %v912 = vunpack.c.l.b16 %v873
        %v913 = vunpack.c.l.b16 %v874
        %v914 = vunpack.c.l.b16 %v875
        %v915 = vunpack.c.l.b16 %v876
        %v916 = vunpack.c.l.b16 %v877
        %v917 = vunpack.c.l.b16 %v878
        %v918 = vunpack.c.l.b16 %v879
        %v919 = vunpack.c.l.b16 %v880
        %v920 = vunpack.c.l.b16 %v881
        %v921 = vunpack.c.l.b16 %v882
        %v922 = vunpack.c.l.b16 %v883
        %v923 = vunpack.c.l.b16 %v884
        %v924 = vunpack.c.l.b16 %v885
        %v925 = vunpack.c.l.b16 %v886
        %v926 = vpack.c.b16 %v911, %v910
        %v927 = vpack.c.b16 %v913, %v912
        %v928 = vpack.c.b16 %v915, %v914
        %v929 = vpack.c.b16 %v917, %v916
        %v930 = vpack.c.b16 %v919, %v918
        %v931 = vpack.c.b16 %v921, %v920
        %v932 = vpack.c.b16 %v923, %v922
        %v933 = vpack.c.b16 %v925, %v924
        %942 = vmatprep.subr.bf16.mxu0 0
        %943 = vmatpush1.bf16.msra.mxu0 %v933
        %944 = vmatprep.subr.bf16.mxu0 0
        %945 = vmatpush1.bf16.msra.mxu0 %v932
        %946 = vmatprep.subr.bf16.mxu0 0
        %947 = vmatpush1.bf16.msra.mxu0 %v931
        %948 = vmatprep.subr.bf16.mxu0 0
        %949 = vmatpush1.bf16.msra.mxu0 %v930
        %950 = vmatprep.subr.bf16.mxu0 0
        %951 = vmatpush1.bf16.msra.mxu0 %v929
        %952 = vmatprep.subr.bf16.mxu0 0
        %953 = vmatpush1.bf16.msra.mxu0 %v928
        %954 = vmatprep.subr.bf16.mxu0 0
        %955 = vmatpush1.bf16.msra.mxu0 %v927
        %956 = vmatprep.subr.bf16.mxu0 0
        %957 = vmatpush1.bf16.msra.mxu0 %v926
        %958 = vmatprep.subr.bf16.mxu0 0
        %959 = vmatpush2.bf16.msra.mxu0 0
        %960 = vmatprep.subr.bf16.mxu0 0
        %961 = vmatpush2.bf16.msra.mxu0 0
        %962 = vmatprep.subr.bf16.mxu0 0
        %963 = vmatpush2.bf16.msra.mxu0 0
        %964 = vmatprep.subr.bf16.mxu0 0
        %965 = vmatpush2.bf16.msra.mxu0 0
        %966 = vmatprep.subr.bf16.mxu0 0
        %967 = vmatpush2.bf16.msra.mxu0 0
        %968 = vmatprep.subr.bf16.mxu0 0
        %969 = vmatpush2.bf16.msra.mxu0 0
        %970 = vmatprep.subr.bf16.mxu0 0
        %971 = vmatpush2.bf16.msra.mxu0 0
        %972 = vmatprep.subr.bf16.mxu0 0
        %973 = vmatpush2.bf16.msra.mxu0 0
        %974 = vmatprep.mubr.bf16.mxu0 0
        %975 = vmatmul.mubr.bf16.gmra.mxu0 %v869
        %v976 = vpop.f32.mrf.mxu0
        %v977 = vadd.f32 %v892, %v976
        %v978 = vpop.f32.mrf.mxu0
        %v979 = vpop.f32.mrf.mxu0
        %v980 = vadd.f32 %v892, %v979
        %v981 = vpop.f32.mrf.mxu0
        %982 = vmatprep.mubr.bf16.mxu0 0
        %983 = vmatmul.mubr.bf16.gmra.mxu0 %v870
        %v984 = vpop.f32.mrf.mxu0
        %v985 = vadd.f32 %v892, %v984
        %v986 = vpop.f32.mrf.mxu0
        %v987 = vpop.f32.mrf.mxu0
        %v988 = vadd.f32 %v892, %v987
        %v989 = vpop.f32.mrf.mxu0
        %990 = vdwg.mxu0
        %991 = vmax.xlane.f32.xlu0 %v977
        %v992 = vpop.xlane.xlu0 %991
        %993 = vmax.xlane.f32.xlu0 %v980
        %v994 = vpop.xlane.xlu0 %993
        %995 = vmax.xlane.f32.xlu0 %v985
        %v996 = vpop.xlane.xlu0 %995
        %997 = vmax.xlane.f32.xlu0 %v988
        %v998 = vpop.xlane.xlu0 %997
        %v999 = vsub.f32 %v977, %v992
        %v1000 = vsub.f32 %v980, %v994
        %v1001 = vsub.f32 %v985, %v996
        %v1002 = vsub.f32 %v988, %v998
        %v1003 = vmul.f32 %v999, 1.442695
        %v1004 = vpow.pop %v1003
        %v1005 = vmul.f32 %v1000, 1.442695
        %v1006 = vpow.pop %v1005
        %v1007 = vmul.f32 %v1001, 1.442695
        %v1008 = vpow.pop %v1007
        %v1009 = vmul.f32 %v1002, 1.442695
        %v1010 = vpow.pop %v1009
        %1011 = vadd.xlane.f32.xlu0 %v1004
        %v1012 = vpop.xlane.xlu0 %1011
        %1013 = vadd.xlane.f32.xlu0 %v1006
        %v1014 = vpop.xlane.xlu0 %1013
        %1015 = vadd.xlane.f32.xlu0 %v1008
        %v1016 = vpop.xlane.xlu0 %1015
        %1017 = vadd.xlane.f32.xlu0 %v1010
        %v1018 = vpop.xlane.xlu0 %1017
        %v1019 = vrcp.pop %v1012
        %v1020 = vmul.f32 %v1004, %v1019
        %v1021 = vrcp.pop %v1014
        %v1022 = vmul.f32 %v1006, %v1021
        %v1023 = vrcp.pop %v1016
        %v1024 = vmul.f32 %v1008, %v1023
        %v1025 = vrcp.pop %v1018
        %v1026 = vmul.f32 %v1010, %v1025
        %v1027 = vpack.c.bf16 %v1022, %v1020
        %v1028 = vpack.c.bf16 %v1026, %v1024
        %v1029 = vld [vmem:[#allocation12] sm:$0xf]
        %v1030 = vld [vmem:[#allocation12 + $0x4] sm:$0xf]
        %v1031 = vld [vmem:[#allocation12 + $0x8] sm:$0xf]
        %v1032 = vld [vmem:[#allocation12 + $0xc] sm:$0xf]
        %v1033 = vld [vmem:[#allocation12 + $0x10] sm:$0xf]
        %v1034 = vld [vmem:[#allocation12 + $0x14] sm:$0xf]
        %v1035 = vld [vmem:[#allocation12 + $0x18] sm:$0xf]
        %v1036 = vld [vmem:[#allocation12 + $0x1c] sm:$0xf]
        %v1037 = vld [vmem:[#allocation12 + $0x20] sm:$0xf]
        %v1038 = vld [vmem:[#allocation12 + $0x24] sm:$0xf]
        %v1039 = vld [vmem:[#allocation12 + $0x28] sm:$0xf]
        %v1040 = vld [vmem:[#allocation12 + $0x2c] sm:$0xf]
        %v1041 = vld [vmem:[#allocation12 + $0x30] sm:$0xf]
        %v1042 = vld [vmem:[#allocation12 + $0x34] sm:$0xf]
        %v1043 = vld [vmem:[#allocation12 + $0x38] sm:$0xf]
        %v1044 = vld [vmem:[#allocation12 + $0x3c] sm:$0xf]
        %v1061 = vunpack.c.l.b16 %v1029
        %v1062 = vunpack.c.l.b16 %v1030
        %v1063 = vunpack.c.l.b16 %v1031
        %v1064 = vunpack.c.l.b16 %v1032
        %v1065 = vunpack.c.l.b16 %v1033
        %v1066 = vunpack.c.l.b16 %v1034
        %v1067 = vunpack.c.l.b16 %v1035
        %v1068 = vunpack.c.l.b16 %v1036
        %v1069 = vunpack.c.l.b16 %v1037
        %v1070 = vunpack.c.l.b16 %v1038
        %v1071 = vunpack.c.l.b16 %v1039
        %v1072 = vunpack.c.l.b16 %v1040
        %v1073 = vunpack.c.l.b16 %v1041
        %v1074 = vunpack.c.l.b16 %v1042
        %v1075 = vunpack.c.l.b16 %v1043
        %v1076 = vunpack.c.l.b16 %v1044
        %v1077 = vpack.c.b16 %v1062, %v1061
        %v1078 = vpack.c.b16 %v1064, %v1063
        %v1079 = vpack.c.b16 %v1066, %v1065
        %v1080 = vpack.c.b16 %v1068, %v1067
        %v1081 = vpack.c.b16 %v1070, %v1069
        %v1082 = vpack.c.b16 %v1072, %v1071
        %v1083 = vpack.c.b16 %v1074, %v1073
        %v1084 = vpack.c.b16 %v1076, %v1075
        %1093 = vmatprep.subr.bf16.mxu0 0
        %1094 = vmatpush1.bf16.msra.mxu0 %v1084
        %1095 = vmatprep.subr.bf16.mxu0 0
        %1096 = vmatpush1.bf16.msra.mxu0 %v1083
        %1097 = vmatprep.subr.bf16.mxu0 0
        %1098 = vmatpush1.bf16.msra.mxu0 %v1082
        %1099 = vmatprep.subr.bf16.mxu0 0
        %1100 = vmatpush1.bf16.msra.mxu0 %v1081
        %1101 = vmatprep.subr.bf16.mxu0 0
        %1102 = vmatpush1.bf16.msra.mxu0 %v1080
        %1103 = vmatprep.subr.bf16.mxu0 0
        %1104 = vmatpush1.bf16.msra.mxu0 %v1079
        %1105 = vmatprep.subr.bf16.mxu0 0
        %1106 = vmatpush1.bf16.msra.mxu0 %v1078
        %1107 = vmatprep.subr.bf16.mxu0 0
        %1108 = vmatpush1.bf16.msra.mxu0 %v1077
        %1109 = vmatprep.subr.bf16.mxu0 0
        %1110 = vmatpush2.bf16.msra.mxu0 0
        %1111 = vmatprep.subr.bf16.mxu0 0
        %1112 = vmatpush2.bf16.msra.mxu0 0
        %1113 = vmatprep.subr.bf16.mxu0 0
        %1114 = vmatpush2.bf16.msra.mxu0 0
        %1115 = vmatprep.subr.bf16.mxu0 0
        %1116 = vmatpush2.bf16.msra.mxu0 0
        %1117 = vmatprep.subr.bf16.mxu0 0
        %1118 = vmatpush2.bf16.msra.mxu0 0
        %1119 = vmatprep.subr.bf16.mxu0 0
        %1120 = vmatpush2.bf16.msra.mxu0 0
        %1121 = vmatprep.subr.bf16.mxu0 0
        %1122 = vmatpush2.bf16.msra.mxu0 0
        %1123 = vmatprep.subr.bf16.mxu0 0
        %1124 = vmatpush2.bf16.msra.mxu0 0
        %1125 = vmatprep.mubr.bf16.mxu0 0
        %1126 = vmatmul.mubr.bf16.gmra.mxu0 %v1027
        %v1127 = vpop.f32.mrf.mxu0
        %v1128 = vadd.f32 0.0, %v1127
        %v1129 = vpop.f32.mrf.mxu0
        %v1130 = vpop.f32.mrf.mxu0
        %v1131 = vadd.f32 0.0, %v1130
        %v1132 = vpop.f32.mrf.mxu0
        %1133 = vmatprep.mubr.bf16.mxu0 0
        %1134 = vmatmul.mubr.bf16.gmra.mxu0 %v1028
        %v1135 = vpop.f32.mrf.mxu0
        %v1136 = vadd.f32 0.0, %v1135
        %v1137 = vpop.f32.mrf.mxu0
        %v1138 = vpop.f32.mrf.mxu0
        %v1139 = vadd.f32 0.0, %v1138
        %v1140 = vpop.f32.mrf.mxu0
        %1141 = vdwg.mxu0
        %v1142 = vpack.c.bf16 %v1131, %v1128
        %v1143 = vpack.c.bf16 %v1139, %v1136
        %v1146 = vunpack.c.l.b16 %v1142
        %v1147 = vunpack.c.h.b16 %v1142
        %v1148 = vunpack.c.l.b16 %v1143
        %v1149 = vunpack.c.h.b16 %v1143
        %v1150 = vpack.c.b16 %v1146, %v1146
        %v1151 = vpack.c.b16 %v1147, %v1147
        %v1152 = vpack.c.b16 %v1148, %v1148
        %v1153 = vpack.c.b16 %v1149, %v1149
        %1158 = vst [vmem:[%s438] sm:$0xf] %v1150
        %1159 = vst [vmem:[%s438 + $0x4] sm:$0xf] %v1151
        %1160 = vst [vmem:[%s438 + $0x8] sm:$0xf] %v1152
        %1161 = vst [vmem:[%s438 + $0xc] sm:$0xf] %v1153
        %s1162 = smul.u32 4, %s26
        %p1163 = scmp.lt.s32.totalorder %s1162, 7
        %s1164 = scalar_select %p1163, %s1162, 7
        %s1165 = smul.addr %s1164, 4
        %s1166 = scalar_lea.vmem %s9, %s1165
        // Predicated region
        $region85: #{_grnet_forward_impl.1} parent=55 // pred_check
          %p1167 = pneg %p238
        $region86: #{_grnet_forward_impl.1} parent=55 // pred_check_branch
          %1169 = sbr.rel (%p1167) target = $region88
        $region87: #{_grnet_forward_impl.1} parent=55 // pred_region
          %s1170 = smul.u32 4, %s26
        $region88: #{_grnet_forward_impl.1} parent=55 // pred_fallthru
          _
      $region56: #{_grnet_forward_impl.1} parent=5 // pred_fallthru
        _
      %p1171 = scmp.le.s32.totalorder 2, %s21
      // Predicated region
      $region89: #{_grnet_forward_impl.1} parent=5 // pred_check
        %p1172 = pneg %p1171
      $region90: #{_grnet_forward_impl.1} parent=5 // pred_check_branch
        %1174 = sbr.rel (%p1172) target = $region92
      $region91: #{_grnet_forward_impl.1} parent=5 // pred_region
        %s1175 = ssub.s32 %s21, 2
        // Predicated region
        $region93: #{_grnet_forward_impl.1} parent=91 // pred_check
          %p1176 = pneg %p244
        $region94: #{_grnet_forward_impl.1} parent=91 // pred_check_branch
          %1178 = sbr.rel (%p1176) target = $region96
        $region95: #{_grnet_forward_impl.1} parent=91 // pred_region
          %s1179 = smul.u32 4, %s27
          %p1180 = scmp.lt.s32.totalorder %s1179, 7
          %s1181 = scalar_select %p1180, %s1179, 7
          %s1182 = smul.addr %s1181, 4
          %s1183 = scalar_lea.vmem %s9, %s1182
        $region96: #{_grnet_forward_impl.1} parent=91 // pred_fallthru
          _
      $region92: #{_grnet_forward_impl.1} parent=5 // pred_fallthru
        _
    $region6: #{_grnet_forward_impl.1} parent=1 // loop_footer
      %s25 = sadd.s32 1, %s21
    $region7: #{_grnet_forward_impl.1} parent=1 // loop_footer_branch
      %20 = sbr.rel target = $region3
    $region8: #{_grnet_forward_impl.1} parent=1 // loop_exit
      _
    %1184 = vsyncpa [#allocation3], 1
    %s1185 = scalar_lea.sflag [#allocation3], 1
    %1186 = vsyncpa %s1185, 1
    %1187 = vsyncpa [#allocation5], 1
    %1188 = vsyncpa [#allocation8], 1
    %1189 = vsyncpa [#allocation11], 1

</llo_original>
